<compile_context>
chip_gen: v5e
topology: v5e:2x2
jax: 0.10.0
libtpu: 0.0.40
codegen_flags: <defaults>
</compile_context>

<pallas_src>
from functools import partial

import jax
import jax.numpy as jnp
from jax import lax
from jax.experimental import pallas as pl
from jax.experimental.pallas import tpu as pltpu


# ----------------------------------------------------------------------------- #
# Fused nearest-x2 upsample + Conv1d(k=3, padding=1) kernel (native layout)
# ----------------------------------------------------------------------------- #
def _upsample2x_conv1d_kernel(x_ref, lh_ref, rh_ref, we_ref, wo_ref, b_ref, o_ref):
    # x_ref : (1, C_in, TL)      native channel-major activation tile
    # lh_ref: (1, 1, C_in, 1)    column x[:, tile_start - 1] (zeros at sequence start)
    # rh_ref: (1, 1, C_in, 1)    column x[:, tile_end]       (zeros at sequence end)
    # we_ref: (C_out, 2*C_in)    [W0 | W1 + W2]
    # wo_ref: (C_out, 2*C_in)    [W0 + W1 | W2]
    # b_ref : (C_out, 1)         bias (f32)
    # o_ref : (1, 2, C_out, TL)  [:,0]=even outputs y[2i], [:,1]=odd outputs y[2i+1]
    x = x_ref[0]                                   # (C_in, TL)
    left = lh_ref[0, 0]                            # (C_in, 1)
    right = rh_ref[0, 0]                           # (C_in, 1)
    tl = x.shape[-1]

    # Neighbor columns built in-register from the tile + halo columns (no HBM pad,
    # no (L+2)-row slab). Lane-shift work rides the VPU/XLU slots, hidden under
    # the MXU / DMA critical path.
    x_prev = jnp.concatenate([left, x[:, : tl - 1]], axis=1)   # x[i-1]
    x_next = jnp.concatenate([x[:, 1:], right], axis=1)        # x[i+1]

    # K-merged operands (K = 2*C_in fills the 256-wide v6e/v7x MXU better than 4
    # separate K=C_in matmuls).
    xe = jnp.concatenate([x_prev, x], axis=0)      # (2*C_in, TL)
    xo = jnp.concatenate([x, x_next], axis=0)      # (2*C_in, TL)

    bias = b_ref[...]                              # (C_out, 1) f32
    even = jnp.dot(we_ref[...], xe, preferred_element_type=jnp.float32) + bias
    odd = jnp.dot(wo_ref[...], xo, preferred_element_type=jnp.float32) + bias

    # Dense lane-major stores (lane dim = TL).
    o_ref[0, 0] = even.astype(o_ref.dtype)
    o_ref[0, 1] = odd.astype(o_ref.dtype)


def _choose_tile_len(l, c_in, c_out, itemsize):
    """Largest lane-aligned L-tile whose per-grid-step VMEM working set fits a
    ~24 MiB budget (safe on v5e/v6e 128 MiB and v7x 64 MiB physical VMEM)."""
    budget = 24 * 1024 * 1024

    def footprint(tl):
        io = 2 * (c_in * tl) * itemsize + 2 * (2 * c_out * tl) * itemsize   # dbl-buffered blocks
        vals = (3 * c_in * tl + 4 * c_in * tl) * itemsize + 2 * c_out * tl * 4  # shifted cols + K-merge + f32 acc
        wts = 2 * 2 * (c_out * 2 * c_in) * itemsize + c_out * 4
        return io + vals + wts

    if l % 128 == 0:
        for tl in (1024, 512, 256, 128):
            if l % tl == 0 and footprint(tl) <= budget:
                return tl
        return 128
    # TODO(synk): pad / emit a cleanup tile for very long L not a multiple of 128.
    return l


@partial(jax.jit, static_argnames=("tile_len",))
def upsample_nearest2x_conv1d_pallas(x, weight, bias, tile_len=None):
    """Fused nearest-x2 upsample + Conv1d(k=3, padding=1)   (use_conv=True path).

    x:      (B, C_in, L)
    weight: (C_out, C_in, 3)   torch nn.Conv1d layout
    bias:   (C_out,)
    returns (B, C_out, 2L)
    """
    b, c_in, l = x.shape
    c_out = weight.shape[0]
    itemsize = x.dtype.itemsize

    tl = tile_len if tile_len is not None else _choose_tile_len(l, c_in, c_out, itemsize)
    assert l % tl == 0 and (tl == l or tl % 128 == 0), "tile_len must divide L and be lane-aligned"
    n_tiles = l // tl

    # Tiny halo-column arrays (one column per tile side), instead of jnp.pad'ing x.
    if n_tiles > 1:
        lcols = x[:, :, tl - 1::tl][:, :, : n_tiles - 1]                  # (B, C_in, n_tiles-1)
        left = jnp.concatenate([jnp.zeros((b, c_in, 1), x.dtype), lcols], axis=2)
        rcols = x[:, :, tl::tl]                                           # (B, C_in, n_tiles-1)
        right = jnp.concatenate([rcols, jnp.zeros((b, c_in, 1), x.dtype)], axis=2)
    else:
        left = jnp.zeros((b, c_in, 1), x.dtype)
        right = jnp.zeros((b, c_in, 1), x.dtype)
    left = jnp.transpose(left, (0, 2, 1))[..., None]                      # (B, n_tiles, C_in, 1)
    right = jnp.transpose(right, (0, 2, 1))[..., None]                    # (B, n_tiles, C_in, 1)

    # Pre-combined taps, concatenated along K (native dtype feeds the MXU directly).
    w0 = weight[:, :, 0]
    w1 = weight[:, :, 1]
    w2 = weight[:, :, 2]
    w_even = jnp.concatenate([w0, w1 + w2], axis=1).astype(x.dtype)       # (C_out, 2*C_in)
    w_odd = jnp.concatenate([w0 + w1, w2], axis=1).astype(x.dtype)        # (C_out, 2*C_in)
    b_col = bias.reshape(c_out, 1).astype(jnp.float32)                    # (C_out, 1)

    flops = 8 * b * l * c_in * c_out
    bytes_accessed = (x.size * itemsize
                      + b * 2 * c_out * l * itemsize
                      + 2 * w_even.size * itemsize
                      + b_col.size * 4
                      + left.size * itemsize * 2)

    out4 = pl.pallas_call(
        _upsample2x_conv1d_kernel,
        out_shape=jax.ShapeDtypeStruct((b, 2, c_out, l), x.dtype),
        grid=(b, n_tiles),
        in_specs=[
            pl.BlockSpec((1, c_in, tl), lambda i, j: (i, 0, j)),          # activations (native)
            pl.BlockSpec((1, 1, c_in, 1), lambda i, j: (i, j, 0, 0)),     # left halo column
            pl.BlockSpec((1, 1, c_in, 1), lambda i, j: (i, j, 0, 0)),     # right halo column
            pl.BlockSpec((c_out, 2 * c_in), lambda i, j: (0, 0)),         # even taps (resident)
            pl.BlockSpec((c_out, 2 * c_in), lambda i, j: (0, 0)),         # odd taps (resident)
            pl.BlockSpec((c_out, 1), lambda i, j: (0, 0)),                # bias
        ],
        out_specs=pl.BlockSpec((1, 2, c_out, tl), lambda i, j: (i, 0, 0, j)),
        compiler_params=pltpu.CompilerParams(
            dimension_semantics=("parallel", "parallel"),
            vmem_limit_bytes=48 * 1024 * 1024),
        cost_estimate=pl.CostEstimate(
            flops=flops, transcendentals=0, bytes_accessed=bytes_accessed),
    )(x, left, right, w_even, w_odd, b_col)

    # (B, 2, C_out, L) -> (B, C_out, L, 2) -> (B, C_out, 2L): the reshape is free
    # (contiguous); the transpose is the single remaining layout pass.
    return jnp.transpose(out4, (0, 2, 3, 1)).reshape(b, c_out, 2 * l)


# ----------------------------------------------------------------------------- #
# use_conv=False path
# ----------------------------------------------------------------------------- #
@jax.jit
def upsample_nearest2x(x):
    """x: (B, C, L) -> (B, C, 2L). Purely memory-bound layout op: plain jnp.repeat
    is the 3-HBM-pass minimum (per perf review), so no Pallas kernel is used here.
    TODO(synk): fuse into a kernel once an in-register lane-interleave is available."""
    return jnp.repeat(x, 2, axis=-1)


# ----------------------------------------------------------------------------- #
# Module wrapper
# ----------------------------------------------------------------------------- #
class Upsample:
    """JAX/Pallas port of the PyTorch Upsample module (dims=1 path)."""

    def __init__(self, channels, use_conv, dims=1, out_channels=None,
                 padding=1, *, key=None, dtype=jnp.float32):
        assert dims == 1, "TODO(synk): dims=2/3 spatial variants not implemented"
        assert padding == 1, "TODO(synk): only padding=1 (module default) supported"
        self.channels = channels
        self.out_channels = out_channels or channels
        self.use_conv = use_conv
        self.dims = dims
        if use_conv:
            assert key is not None
            kw, kb = jax.random.split(key)
            fan_in = channels * 3
            bound = 1.0 / (fan_in ** 0.5)
            self.weight = jax.random.uniform(
                kw, (self.out_channels, channels, 3), dtype, -bound, bound)
            self.bias = jax.random.uniform(
                kb, (self.out_channels,), dtype, -bound, bound)

    def __call__(self, x):
        assert x.shape[1] == self.channels
        if self.use_conv:
            return upsample_nearest2x_conv1d_pallas(x, self.weight, self.bias)
        return upsample_nearest2x(x)


# ----------------------------------------------------------------------------- #
# Self-test
# ----------------------------------------------------------------------------- #
def _conv_reference(x, weight, bias):
    x_up = jnp.repeat(x, 2, axis=-1)
    return lax.conv_general_dilated(
        x_up, weight, window_strides=(1,), padding=((1, 1),),
        dimension_numbers=("NCH", "OIH", "NCH")) + bias[None, :, None]


if __name__ == "__main__":
    batch, channels, out_channels, length = 2, 8, 16, 16

    key = jax.random.PRNGKey(0)
    kx, kp, kx2 = jax.random.split(key, 3)
    x = jax.random.normal(kx, (batch, channels, length), dtype=jnp.float32)

    # --- use_conv=True path (single L tile) ---
    up_conv = Upsample(channels, use_conv=True, dims=1,
                       out_channels=out_channels, key=kp)
    out = up_conv(x)
    jax.block_until_ready(out)
    ref = _conv_reference(x, up_conv.weight, up_conv.bias)
    assert out.shape == (batch, out_channels, 2 * length)
    assert jnp.allclose(out, ref, atol=1e-5, rtol=1e-5), "conv path mismatch vs reference"

    # --- use_conv=True path, forced multi-tile grid (exercises the halo logic) ---
    length2 = 256
    x2 = jax.random.normal(kx2, (batch, channels, length2), dtype=jnp.float32)
    out2 = upsample_nearest2x_conv1d_pallas(x2, up_conv.weight, up_conv.bias, tile_len=128)
    jax.block_until_ready(out2)
    ref2 = _conv_reference(x2, up_conv.weight, up_conv.bias)
    assert jnp.allclose(out2, ref2, atol=1e-5, rtol=1e-5), "tiled conv path mismatch vs reference"

    # --- use_conv=False path ---
    up_plain = Upsample(channels, use_conv=False, dims=1)
    out3 = up_plain(x)
    jax.block_until_ready(out3)
    assert jnp.allclose(out3, jnp.repeat(x, 2, axis=-1), atol=1e-6), "upsample mismatch"

    print("KERNEL_OK")
</pallas_src>

<mosaic_0001>
module attributes {stable_mosaic.version = 11 : i64} {
  func.func @_upsample2x_conv1d_kernel(%arg0: i32, %arg1: i32, %arg2: memref<1x8x16xf32, #tpu.memory_space<vmem>>, %arg3: memref<1x1x8x1xf32, #tpu.memory_space<vmem>>, %arg4: memref<1x1x8x1xf32, #tpu.memory_space<vmem>>, %arg5: memref<16x16xf32, #tpu.memory_space<vmem>>, %arg6: memref<16x16xf32, #tpu.memory_space<vmem>>, %arg7: memref<16x1xf32, #tpu.memory_space<vmem>>, %arg8: memref<1x2x16x16xf32, #tpu.memory_space<vmem>>) attributes {dimension_semantics = [#tpu.dimension_semantics<parallel>, #tpu.dimension_semantics<parallel>], iteration_bounds = array<i64: 2, 1>, scalar_prefetch = 0 : i64, scratch_operands = 0 : i64, tpu.core_type = #tpu.core_type<tc>, window_params = [{transform_indices = @transform_0, window_bounds = array<i64: 1, 8, 16>}, {transform_indices = @transform_1, window_bounds = array<i64: 1, 1, 8, 1>}, {transform_indices = @transform_2, window_bounds = array<i64: 1, 1, 8, 1>}, {pipeline_mode = #tpu.pipeline_mode<synchronous>, transform_indices = @transform_3, window_bounds = array<i64: 16, 16>}, {pipeline_mode = #tpu.pipeline_mode<synchronous>, transform_indices = @transform_4, window_bounds = array<i64: 16, 16>}, {pipeline_mode = #tpu.pipeline_mode<synchronous>, transform_indices = @transform_5, window_bounds = array<i64: 16, 1>}, {transform_indices = @transform_6, window_bounds = array<i64: 1, 2, 16, 16>}]} {
    %c0 = arith.constant 0 : index
    %c0_0 = arith.constant 0 : index
    %c0_1 = arith.constant 0 : index
    %0 = vector.load %arg2[%c0, %c0_0, %c0_1] : memref<1x8x16xf32, #tpu.memory_space<vmem>>, vector<1x8x16xf32>
    %1 = vector.shape_cast %0 : vector<1x8x16xf32> to vector<8x16xf32>
    %c0_2 = arith.constant 0 : index
    %c0_3 = arith.constant 0 : index
    %c0_4 = arith.constant 0 : index
    %c0_5 = arith.constant 0 : index
    %2 = vector.load %arg3[%c0_2, %c0_3, %c0_4, %c0_5] : memref<1x1x8x1xf32, #tpu.memory_space<vmem>>, vector<1x1x8x1xf32>
    %3 = vector.shape_cast %2 : vector<1x1x8x1xf32> to vector<8x1xf32>
    %c0_6 = arith.constant 0 : index
    %c0_7 = arith.constant 0 : index
    %c0_8 = arith.constant 0 : index
    %c0_9 = arith.constant 0 : index
    %4 = vector.load %arg4[%c0_6, %c0_7, %c0_8, %c0_9] : memref<1x1x8x1xf32, #tpu.memory_space<vmem>>, vector<1x1x8x1xf32>
    %5 = vector.shape_cast %4 : vector<1x1x8x1xf32> to vector<8x1xf32>
    %6 = vector.extract_strided_slice %1 {offsets = [0, 0], sizes = [8, 15], strides = [1, 1]} : vector<8x16xf32> to vector<8x15xf32>
    %7 = tpu.concatenate %3, %6 in 1 : vector<8x1xf32>, vector<8x15xf32> -> vector<8x16xf32>
    %8 = vector.extract_strided_slice %1 {offsets = [0, 1], sizes = [8, 15], strides = [1, 1]} : vector<8x16xf32> to vector<8x15xf32>
    %9 = tpu.concatenate %8, %5 in 1 : vector<8x15xf32>, vector<8x1xf32> -> vector<8x16xf32>
    %10 = tpu.concatenate %7, %1 in 0 : vector<8x16xf32>, vector<8x16xf32> -> vector<16x16xf32>
    %11 = tpu.concatenate %1, %9 in 0 : vector<8x16xf32>, vector<8x16xf32> -> vector<16x16xf32>
    %c0_10 = arith.constant 0 : index
    %c0_11 = arith.constant 0 : index
    %12 = vector.load %arg7[%c0_10, %c0_11] : memref<16x1xf32, #tpu.memory_space<vmem>>, vector<16x1xf32>
    %c0_12 = arith.constant 0 : index
    %c0_13 = arith.constant 0 : index
    %13 = vector.load %arg5[%c0_12, %c0_13] : memref<16x16xf32, #tpu.memory_space<vmem>>, vector<16x16xf32>
    %cst = arith.constant dense<0.000000e+00> : vector<16x16xf32>
    %14 = tpu.matmul %13, %10, %cst {dimension_numbers = #tpu.dot_dimension_numbers<[1], [0], [0], [1], [0, 0, 1, 1], [], []>} : vector<16x16xf32>, vector<16x16xf32>, vector<16x16xf32> -> vector<16x16xf32>
    %15 = vector.broadcast %12 : vector<16x1xf32> to vector<16x16xf32>
    %16 = arith.addf %14, %15 : vector<16x16xf32>
    %c0_14 = arith.constant 0 : index
    %c0_15 = arith.constant 0 : index
    %17 = vector.load %arg6[%c0_14, %c0_15] : memref<16x16xf32, #tpu.memory_space<vmem>>, vector<16x16xf32>
    %cst_16 = arith.constant dense<0.000000e+00> : vector<16x16xf32>
    %18 = tpu.matmul %17, %11, %cst_16 {dimension_numbers = #tpu.dot_dimension_numbers<[1], [0], [0], [1], [0, 0, 1, 1], [], []>} : vector<16x16xf32>, vector<16x16xf32>, vector<16x16xf32> -> vector<16x16xf32>
    %19 = vector.broadcast %12 : vector<16x1xf32> to vector<16x16xf32>
    %20 = arith.addf %18, %19 : vector<16x16xf32>
    %c0_17 = arith.constant 0 : index
    %c0_18 = arith.constant 0 : index
    %c0_19 = arith.constant 0 : index
    %c0_20 = arith.constant 0 : index
    %21 = vector.load %arg8[%c0_17, %c0_18, %c0_19, %c0_20] : memref<1x2x16x16xf32, #tpu.memory_space<vmem>>, vector<1x1x16x16xf32>
    %22 = vector.shape_cast %21 : vector<1x1x16x16xf32> to vector<16x16xf32>
    %23 = vector.shape_cast %16 : vector<16x16xf32> to vector<1x1x16x16xf32>
    tpu.vector_store %arg8[%c0_17, %c0_18, %c0_19, %c0_20], %23 {strides = array<i32>} : memref<1x2x16x16xf32, #tpu.memory_space<vmem>>, vector<1x1x16x16xf32>,
    %c0_21 = arith.constant 0 : index
    %c1 = arith.constant 1 : index
    %c0_22 = arith.constant 0 : index
    %c0_23 = arith.constant 0 : index
    %24 = vector.load %arg8[%c0_21, %c1, %c0_22, %c0_23] : memref<1x2x16x16xf32, #tpu.memory_space<vmem>>, vector<1x1x16x16xf32>
    %25 = vector.shape_cast %24 : vector<1x1x16x16xf32> to vector<16x16xf32>
    %26 = vector.shape_cast %20 : vector<16x16xf32> to vector<1x1x16x16xf32>
    tpu.vector_store %arg8[%c0_21, %c1, %c0_22, %c0_23], %26 {strides = array<i32>} : memref<1x2x16x16xf32, #tpu.memory_space<vmem>>, vector<1x1x16x16xf32>,
    return
  }
  func.func @transform_0(%arg0: i32, %arg1: i32) -> (i32, i32, i32) {
    %c0_i32 = arith.constant 0 : i32
    %c0_i32_0 = arith.constant 0 : i32
    return %arg0, %c0_i32, %arg1 : i32, i32, i32
  }
  func.func @transform_1(%arg0: i32, %arg1: i32) -> (i32, i32, i32, i32) {
    %c0_i32 = arith.constant 0 : i32
    %c0_i32_0 = arith.constant 0 : i32
    %c0_i32_1 = arith.constant 0 : i32
    return %arg0, %arg1, %c0_i32, %c0_i32_0 : i32, i32, i32, i32
  }
  func.func @transform_2(%arg0: i32, %arg1: i32) -> (i32, i32, i32, i32) {
    %c0_i32 = arith.constant 0 : i32
    %c0_i32_0 = arith.constant 0 : i32
    %c0_i32_1 = arith.constant 0 : i32
    return %arg0, %arg1, %c0_i32, %c0_i32_0 : i32, i32, i32, i32
  }
  func.func @transform_3(%arg0: i32, %arg1: i32) -> (i32, i32) {
    %c0_i32 = arith.constant 0 : i32
    %c0_i32_0 = arith.constant 0 : i32
    %c0_i32_1 = arith.constant 0 : i32
    return %c0_i32, %c0_i32_0 : i32, i32
  }
  func.func @transform_4(%arg0: i32, %arg1: i32) -> (i32, i32) {
    %c0_i32 = arith.constant 0 : i32
    %c0_i32_0 = arith.constant 0 : i32
    %c0_i32_1 = arith.constant 0 : i32
    return %c0_i32, %c0_i32_0 : i32, i32
  }
  func.func @transform_5(%arg0: i32, %arg1: i32) -> (i32, i32) {
    %c0_i32 = arith.constant 0 : i32
    %c0_i32_0 = arith.constant 0 : i32
    %c0_i32_1 = arith.constant 0 : i32
    return %c0_i32, %c0_i32_0 : i32, i32
  }
  func.func @transform_6(%arg0: i32, %arg1: i32) -> (i32, i32, i32, i32) {
    %c0_i32 = arith.constant 0 : i32
    %c0_i32_0 = arith.constant 0 : i32
    %c0_i32_1 = arith.constant 0 : i32
    return %arg0, %c0_i32, %c0_i32_0, %arg1 : i32, i32, i32, i32
  }
}

</mosaic_0001>

<llo_original>
// kernel: upsample_nearest2x_conv1d_pallas.1
$region0: #{upsample_nearest2x_conv1d_pallas.1}
  #allocation0 [shape = 'u32[]', space=smem, size = 0x4, offset = 0x4, fixed_abs, tag = 'smem constant byte address 0x4 - core index']
  #allocation1 [shape = 'u32[72,128]{1,0:T(1,128)}', space=vmem, size = 0x9000, scoped, tag = 'internal scratch']
  %s0 = inlined_call_operand.vmem [shape: f32[2,8,16], index: 0, kind: input, shape index: {}]
  %s1 = inlined_call_operand.vmem [shape: f32[2,1,8,1], index: 1, kind: input, shape index: {}, may-alias: {1,2}]
  %s2 = inlined_call_operand.vmem [shape: f32[2,1,8,1], index: 2, kind: input, shape index: {}, may-alias: {1,2}]
  %s3 = inlined_call_operand.vmem [shape: f32[16,16], index: 3, kind: input, shape index: {}]
  %s4 = inlined_call_operand.vmem [shape: f32[16,16], index: 4, kind: input, shape index: {}]
  %s5 = inlined_call_operand.vmem [shape: f32[16,1], index: 5, kind: input, shape index: {}]
  %s6 = inlined_call_operand.vmem [shape: f32[2,2,16,16], index: 6, kind: output, shape index: {}]
  %s7 = sld [smem:[#allocation0]]
  $region57: #{upsample_nearest2x_conv1d_pallas.1} parent=0
    _
  %s9 = ssub.s32 1, %s7
  %s10 = scalar_select 0, %s9, %s7
  loop: start=0, step=1, limit=4
  $region2: #{upsample_nearest2x_conv1d_pallas.1} parent=0 // loop_pre_header
    _
  $region3: #{upsample_nearest2x_conv1d_pallas.1} parent=0 // loop_header
    %s12 = sphi 0, %s16
    %p13 = scmp.ge.s32.totalorder %s12, 4
    %s19 = sphi 0, %s31
    %s20 = sphi 0, %s27
    %s21 = sphi 0, %s19
    %s22 = sphi 0, %s20
    %s23 = sphi 0, %s21
    %s24 = sphi 0, %s22
    %s36 = sphi 0, %s38
    %s39 = sphi 0, %s36
    %s40 = sphi 0, %s39
    %s56 = sphi 0, %s40
    %s64 = sphi 0, %s66
    %s67 = sphi 0, %s64
    %s68 = sphi 0, %s67
    %s84 = sphi 0, %s68
    %s92 = sphi 0, %s94
    %s95 = sphi 0, %s92
    %s96 = sphi 0, %s95
    %s112 = sphi 0, %s96
    %s116 = sphi 0, %s116
    %s118 = sphi 0, %s116
    %s119 = sphi 0, %s118
    %s133 = sphi 0, %s119
    %s137 = sphi 0, %s137
    %s139 = sphi 0, %s137
    %s140 = sphi 0, %s139
    %s154 = sphi 0, %s140
    %s158 = sphi 0, %s158
    %s160 = sphi 0, %s158
    %s161 = sphi 0, %s160
    %s175 = sphi 0, %s161
    %s183 = sphi 0, %s185
    %s186 = sphi 0, %s183
    %s187 = sphi 0, %s186
    %s203 = sphi 0, %s187
  $region4: #{upsample_nearest2x_conv1d_pallas.1} parent=0 // loop_header_branch
    %15 = sbr.rel (%p13) target = $region8
  $region5: #{upsample_nearest2x_conv1d_pallas.1} parent=0 // loop_body
    %s17 = ssub.s32 %s12, 1
    %s18 = ssub.s32 %s12, 2
    %s25 = sadd.s32 1, %s20
    %p26 = scmp.ge.s32.totalorder %s25, 1
    %s27 = scalar_select %p26, 0, %s25
    %s28 = sadd.s32 1, %s19
    %s29 = scalar_select %p26, %s28, %s19
    %p30 = scmp.ge.s32.totalorder %s29, 2
    %s31 = scalar_select %p30, 0, %s29
    %s32 = ssub.s32 %s19, %s31
    %s33 = ssub.s32 %s20, %s27
    %s34 = sor.u32 %s32, %s33
    %p35 = scmp.eq.s32.totalorder %s34, 0
    %s37 = sadd.s32 %s36, 1
    %s38 = scalar_select %p35, %s36, %s37
    %p41 = pneg %p35
    %p42 = scmp.eq.s32.totalorder %s12, 1
    %p43 = por %p41, %p42
    %p44 = scmp.ne.s32.totalorder %s36, %s39
    %p45 = scmp.eq.s32.totalorder %s12, 0
    %p46 = por %p44, %p45
    %p47 = scmp.ne.s32.totalorder %s36, %s39
    %p48 = scmp.eq.s32.totalorder %s17, 1
    %p49 = por %p47, %p48
    %p50 = scmp.ne.s32.totalorder %s39, %s40
    %p51 = scmp.eq.s32.totalorder %s17, 0
    %p52 = por %p50, %p51
    %p53 = scmp.ne.s32.totalorder %s39, %s40
    %p54 = scmp.eq.s32.totalorder %s18, 1
    %p55 = por %p53, %p54
    %p57 = scmp.ne.s32.totalorder %s40, %s56
    %p58 = scmp.eq.s32.totalorder %s18, 0
    %p59 = por %p57, %p58
    %s60 = ssub.s32 %s19, %s31
    %s61 = ssub.s32 %s20, %s27
    %s62 = sor.u32 %s60, %s61
    %p63 = scmp.eq.s32.totalorder %s62, 0
    %s65 = sadd.s32 %s64, 1
    %s66 = scalar_select %p63, %s64, %s65
    %p69 = pneg %p63
    %p70 = scmp.eq.s32.totalorder %s12, 1
    %p71 = por %p69, %p70
    %p72 = scmp.ne.s32.totalorder %s64, %s67
    %p73 = scmp.eq.s32.totalorder %s12, 0
    %p74 = por %p72, %p73
    %p75 = scmp.ne.s32.totalorder %s64, %s67
    %p76 = scmp.eq.s32.totalorder %s17, 1
    %p77 = por %p75, %p76
    %p78 = scmp.ne.s32.totalorder %s67, %s68
    %p79 = scmp.eq.s32.totalorder %s17, 0
    %p80 = por %p78, %p79
    %p81 = scmp.ne.s32.totalorder %s67, %s68
    %p82 = scmp.eq.s32.totalorder %s18, 1
    %p83 = por %p81, %p82
    %p85 = scmp.ne.s32.totalorder %s68, %s84
    %p86 = scmp.eq.s32.totalorder %s18, 0
    %p87 = por %p85, %p86
    %s88 = ssub.s32 %s19, %s31
    %s89 = ssub.s32 %s20, %s27
    %s90 = sor.u32 %s88, %s89
    %p91 = scmp.eq.s32.totalorder %s90, 0
    %s93 = sadd.s32 %s92, 1
    %s94 = scalar_select %p91, %s92, %s93
    %p97 = pneg %p91
    %p98 = scmp.eq.s32.totalorder %s12, 1
    %p99 = por %p97, %p98
    %p100 = scmp.ne.s32.totalorder %s92, %s95
    %p101 = scmp.eq.s32.totalorder %s12, 0
    %p102 = por %p100, %p101
    %p103 = scmp.ne.s32.totalorder %s92, %s95
    %p104 = scmp.eq.s32.totalorder %s17, 1
    %p105 = por %p103, %p104
    %p106 = scmp.ne.s32.totalorder %s95, %s96
    %p107 = scmp.eq.s32.totalorder %s17, 0
    %p108 = por %p106, %p107
    %p109 = scmp.ne.s32.totalorder %s95, %s96
    %p110 = scmp.eq.s32.totalorder %s18, 1
    %p111 = por %p109, %p110
    %p113 = scmp.ne.s32.totalorder %s96, %s112
    %p114 = scmp.eq.s32.totalorder %s18, 0
    %p115 = por %p113, %p114
    %s117 = sadd.s32 %s116, 1
    %p120 = scmp.eq.s32.totalorder %s12, 1
    %p121 = scmp.ne.s32.totalorder %s116, %s118
    %p122 = scmp.eq.s32.totalorder %s12, 0
    %p123 = por %p121, %p122
    %p124 = scmp.ne.s32.totalorder %s116, %s118
    %p125 = scmp.eq.s32.totalorder %s17, 1
    %p126 = por %p124, %p125
    %p127 = scmp.ne.s32.totalorder %s118, %s119
    %p128 = scmp.eq.s32.totalorder %s17, 0
    %p129 = por %p127, %p128
    %p130 = scmp.ne.s32.totalorder %s118, %s119
    %p131 = scmp.eq.s32.totalorder %s18, 1
    %p132 = por %p130, %p131
    %p134 = scmp.ne.s32.totalorder %s119, %s133
    %p135 = scmp.eq.s32.totalorder %s18, 0
    %p136 = por %p134, %p135
    %s138 = sadd.s32 %s137, 1
    %p141 = scmp.eq.s32.totalorder %s12, 1
    %p142 = scmp.ne.s32.totalorder %s137, %s139
    %p143 = scmp.eq.s32.totalorder %s12, 0
    %p144 = por %p142, %p143
    %p145 = scmp.ne.s32.totalorder %s137, %s139
    %p146 = scmp.eq.s32.totalorder %s17, 1
    %p147 = por %p145, %p146
    %p148 = scmp.ne.s32.totalorder %s139, %s140
    %p149 = scmp.eq.s32.totalorder %s17, 0
    %p150 = por %p148, %p149
    %p151 = scmp.ne.s32.totalorder %s139, %s140
    %p152 = scmp.eq.s32.totalorder %s18, 1
    %p153 = por %p151, %p152
    %p155 = scmp.ne.s32.totalorder %s140, %s154
    %p156 = scmp.eq.s32.totalorder %s18, 0
    %p157 = por %p155, %p156
    %s159 = sadd.s32 %s158, 1
    %p162 = scmp.eq.s32.totalorder %s12, 1
    %p163 = scmp.ne.s32.totalorder %s158, %s160
    %p164 = scmp.eq.s32.totalorder %s12, 0
    %p165 = por %p163, %p164
    %p166 = scmp.ne.s32.totalorder %s158, %s160
    %p167 = scmp.eq.s32.totalorder %s17, 1
    %p168 = por %p166, %p167
    %p169 = scmp.ne.s32.totalorder %s160, %s161
    %p170 = scmp.eq.s32.totalorder %s17, 0
    %p171 = por %p169, %p170
    %p172 = scmp.ne.s32.totalorder %s160, %s161
    %p173 = scmp.eq.s32.totalorder %s18, 1
    %p174 = por %p172, %p173
    %p176 = scmp.ne.s32.totalorder %s161, %s175
    %p177 = scmp.eq.s32.totalorder %s18, 0
    %p178 = por %p176, %p177
    %s179 = ssub.s32 %s19, %s31
    %s180 = ssub.s32 %s20, %s27
    %s181 = sor.u32 %s179, %s180
    %p182 = scmp.eq.s32.totalorder %s181, 0
    %s184 = sadd.s32 %s183, 1
    %s185 = scalar_select %p182, %s183, %s184
    %p188 = pneg %p182
    %p189 = scmp.eq.s32.totalorder %s12, 1
    %p190 = por %p188, %p189
    %p191 = scmp.ne.s32.totalorder %s183, %s186
    %p192 = scmp.eq.s32.totalorder %s12, 0
    %p193 = por %p191, %p192
    %p194 = scmp.ne.s32.totalorder %s183, %s186
    %p195 = scmp.eq.s32.totalorder %s17, 1
    %p196 = por %p194, %p195
    %p197 = scmp.ne.s32.totalorder %s186, %s187
    %p198 = scmp.eq.s32.totalorder %s17, 0
    %p199 = por %p197, %p198
    %p200 = scmp.ne.s32.totalorder %s186, %s187
    %p201 = scmp.eq.s32.totalorder %s18, 1
    %p202 = por %p200, %p201
    %p204 = scmp.ne.s32.totalorder %s187, %s203
    %p205 = scmp.eq.s32.totalorder %s18, 0
    %p206 = por %p204, %p205
    %p207 = scmp.le.s32.totalorder 1, %s12
    %p208 = scmp.lt.s32.totalorder %s12, 3
    %p209 = pnand %p207, %p208
    %p210 = pneg %p209
    // Predicated region
    $region9: #{upsample_nearest2x_conv1d_pallas.1} parent=5 // pred_check
      _
    $region10: #{upsample_nearest2x_conv1d_pallas.1} parent=5 // pred_check_branch
      %212 = sbr.rel (%p209) target = $region12
    $region11: #{upsample_nearest2x_conv1d_pallas.1} parent=5 // pred_region
      %s213 = ssub.s32 %s12, 1
      // Predicated region
      $region13: #{upsample_nearest2x_conv1d_pallas.1} parent=11 // pred_check
        %p214 = pneg %p129
      $region14: #{upsample_nearest2x_conv1d_pallas.1} parent=11 // pred_check_branch
        %216 = sbr.rel (%p214) target = $region16
      $region15: #{upsample_nearest2x_conv1d_pallas.1} parent=11 // pred_region
        _
      $region16: #{upsample_nearest2x_conv1d_pallas.1} parent=11 // pred_fallthru
        _
      // Predicated region
      $region17: #{upsample_nearest2x_conv1d_pallas.1} parent=11 // pred_check
        %p217 = pneg %p150
      $region18: #{upsample_nearest2x_conv1d_pallas.1} parent=11 // pred_check_branch
        %219 = sbr.rel (%p217) target = $region20
      $region19: #{upsample_nearest2x_conv1d_pallas.1} parent=11 // pred_region
        _
      $region20: #{upsample_nearest2x_conv1d_pallas.1} parent=11 // pred_fallthru
        _
      // Predicated region
      $region21: #{upsample_nearest2x_conv1d_pallas.1} parent=11 // pred_check
        %p220 = pneg %p171
      $region22: #{upsample_nearest2x_conv1d_pallas.1} parent=11 // pred_check_branch
        %222 = sbr.rel (%p220) target = $region24
      $region23: #{upsample_nearest2x_conv1d_pallas.1} parent=11 // pred_region
        _
      $region24: #{upsample_nearest2x_conv1d_pallas.1} parent=11 // pred_fallthru
        _
    $region12: #{upsample_nearest2x_conv1d_pallas.1} parent=5 // pred_fallthru
      _
    %p223 = scmp.lt.s32.totalorder %s12, 2
    // Predicated region
    $region25: #{upsample_nearest2x_conv1d_pallas.1} parent=5 // pred_check
      %p224 = pneg %p223
    $region26: #{upsample_nearest2x_conv1d_pallas.1} parent=5 // pred_check_branch
      %226 = sbr.rel (%p224) target = $region28
    $region27: #{upsample_nearest2x_conv1d_pallas.1} parent=5 // pred_region
      // Predicated region
      $region29: #{upsample_nearest2x_conv1d_pallas.1} parent=27 // pred_check
        %p227 = pneg %p46
      $region30: #{upsample_nearest2x_conv1d_pallas.1} parent=27 // pred_check_branch
        %229 = sbr.rel (%p227) target = $region32
      $region31: #{upsample_nearest2x_conv1d_pallas.1} parent=27 // pred_region
        %p230 = scmp.lt.s32.totalorder %s19, 1
        %s231 = scalar_select %p230, %s19, 1
        %p232 = scmp.lt.s32.totalorder %s20, 0
        %s233 = scalar_select %p232, %s20, 0
        %s234 = sadd.s32 %s233, %s231
        %s235 = smul.addr %s234, 8
        %s236 = scalar_lea.vmem %s0, %s235
      $region32: #{upsample_nearest2x_conv1d_pallas.1} parent=27 // pred_fallthru
        _
      // Predicated region
      $region33: #{upsample_nearest2x_conv1d_pallas.1} parent=27 // pred_check
        %p237 = pneg %p74
      $region34: #{upsample_nearest2x_conv1d_pallas.1} parent=27 // pred_check_branch
        %239 = sbr.rel (%p237) target = $region36
      $region35: #{upsample_nearest2x_conv1d_pallas.1} parent=27 // pred_region
        %p240 = scmp.lt.s32.totalorder %s19, 1
        %s241 = scalar_select %p240, %s19, 1
        %p242 = scmp.lt.s32.totalorder %s20, 0
        %s243 = scalar_select %p242, %s20, 0
        %s244 = sadd.s32 %s243, %s241
        %s245 = smul.addr %s244, 8
        %s246 = scalar_lea.vmem %s1, %s245
      $region36: #{upsample_nearest2x_conv1d_pallas.1} parent=27 // pred_fallthru
        _
      // Predicated region
      $region37: #{upsample_nearest2x_conv1d_pallas.1} parent=27 // pred_check
        %p247 = pneg %p102
      $region38: #{upsample_nearest2x_conv1d_pallas.1} parent=27 // pred_check_branch
        %249 = sbr.rel (%p247) target = $region40
      $region39: #{upsample_nearest2x_conv1d_pallas.1} parent=27 // pred_region
        %p250 = scmp.lt.s32.totalorder %s19, 1
        %s251 = scalar_select %p250, %s19, 1
        %p252 = scmp.lt.s32.totalorder %s20, 0
        %s253 = scalar_select %p252, %s20, 0
        %s254 = sadd.s32 %s253, %s251
        %s255 = smul.addr %s254, 8
        %s256 = scalar_lea.vmem %s2, %s255
      $region40: #{upsample_nearest2x_conv1d_pallas.1} parent=27 // pred_fallthru
        _
    $region28: #{upsample_nearest2x_conv1d_pallas.1} parent=5 // pred_fallthru
      _
    %p257 = scmp.le.s32.totalorder 1, %s12
    %p258 = scmp.lt.s32.totalorder %s12, 3
    %p259 = pnand %p257, %p258
    %p260 = pneg %p259
    // Predicated region
    $region41: #{upsample_nearest2x_conv1d_pallas.1} parent=5 // pred_check
      _
    $region42: #{upsample_nearest2x_conv1d_pallas.1} parent=5 // pred_check_branch
      %262 = sbr.rel (%p259) target = $region44
    $region43: #{upsample_nearest2x_conv1d_pallas.1} parent=5 // pred_region
      %s263 = ssub.s32 %s12, 1
      %p264 = scmp.lt.s32.totalorder %s21, 1
      %s265 = scalar_select %p264, %s21, 1
      %p266 = scmp.lt.s32.totalorder %s22, 0
      %s267 = scalar_select %p266, %s22, 0
      %s268 = sadd.s32 %s267, %s265
      %s269 = smul.addr %s268, 8
      %s270 = scalar_lea.vmem %s0, %s269
      %p271 = pneg %p52
      %p272 = pneg %p49
      %p273 = scmp.lt.s32.totalorder %s21, 1
      %s274 = scalar_select %p273, %s21, 1
      %p275 = scmp.lt.s32.totalorder %s22, 0
      %s276 = scalar_select %p275, %s22, 0
      %s277 = sadd.s32 %s276, %s274
      %s278 = smul.addr %s277, 8
      %s279 = scalar_lea.vmem %s1, %s278
      %p280 = pneg %p80
      %p281 = pneg %p77
      %p282 = scmp.lt.s32.totalorder %s21, 1
      %s283 = scalar_select %p282, %s21, 1
      %p284 = scmp.lt.s32.totalorder %s22, 0
      %s285 = scalar_select %p284, %s22, 0
      %s286 = sadd.s32 %s285, %s283
      %s287 = smul.addr %s286, 8
      %s288 = scalar_lea.vmem %s2, %s287
      %p289 = pneg %p108
      %p290 = pneg %p105
      %p291 = pneg %p129
      %p292 = pneg %p126
      %p293 = pneg %p150
      %p294 = pneg %p147
      %p295 = pneg %p171
      %p296 = pneg %p168
      %p297 = pneg %p199
      %p298 = pneg %p196
      %p299 = scmp.lt.s32.totalorder %s21, 1
      %s300 = scalar_select %p299, %s21, 1
      %p301 = scmp.lt.s32.totalorder %s22, 0
      %s302 = scalar_select %p301, %s22, 0
      %s303 = smul.addr %s300, 4
      %s304 = sadd.s32 %s302, %s303
      %s305 = smul.addr %s304, 8
      %s306 = scalar_lea.vmem %s6, %s305
      %p307 = scmp.lt.s32.totalorder %s21, 1
      %s308 = scalar_select %p307, %s21, 1
      %p309 = scmp.lt.s32.totalorder %s22, 0
      %s310 = scalar_select %p309, %s22, 0
      %s311 = sadd.s32 %s310, %s308
      %s312 = smul.addr %s311, 8
      %s313 = scalar_lea.vmem %s0, %s312
      %p314 = scmp.lt.s32.totalorder %s21, 1
      %s315 = scalar_select %p314, %s21, 1
      %p316 = scmp.lt.s32.totalorder %s22, 0
      %s317 = scalar_select %p316, %s22, 0
      %s318 = sadd.s32 %s317, %s315
      %s319 = smul.addr %s318, 8
      %s320 = scalar_lea.vmem %s1, %s319
      %p321 = scmp.lt.s32.totalorder %s21, 1
      %s322 = scalar_select %p321, %s21, 1
      %p323 = scmp.lt.s32.totalorder %s22, 0
      %s324 = scalar_select %p323, %s22, 0
      %s325 = sadd.s32 %s324, %s322
      %s326 = smul.addr %s325, 8
      %s327 = scalar_lea.vmem %s2, %s326
      %p328 = scmp.lt.s32.totalorder %s21, 1
      %s329 = scalar_select %p328, %s21, 1
      %p330 = scmp.lt.s32.totalorder %s22, 0
      %s331 = scalar_select %p330, %s22, 0
      %s332 = smul.addr %s329, 4
      %s333 = sadd.s32 %s331, %s332
      %s334 = smul.addr %s333, 8
      %s335 = scalar_lea.vmem %s6, %s334
      %v336 = vld [vmem:[%s313] sm:$0xff]
      %v337 = vld [vmem:[%s320] sm:$0xff]
      %v338 = vld [vmem:[%s327] sm:$0xff]
      %340 = vrot.lane.b32.xlu0 %v336, 1
      %v341 = vpop.permute.xlu0 %340
      %vm343 = vcmask 7168
      %v344 = vsel %vm343, %v337, %v341
      %345 = vrot.lane.b32.xlu0 %v336, 127
      %v346 = vpop.permute.xlu0 %345
      %349 = vrot.lane.b32.xlu0 %v338, 15
      %v350 = vpop.permute.xlu0 %349
      %vm352 = vcmask 121856
      %v353 = vsel %vm352, %v346, %v350
      %v354 = vld [vmem:[%s5] sm:$0xff]
      %v355 = vld [vmem:[%s5 + $0x8] sm:$0xff]
      %v356 = vld [vmem:[%s3] sm:$0xff]
      %v357 = vld [vmem:[%s3 + $0x8] sm:$0xff]
      %359 = vset.pattern.permute.xlu0 0
      %360 = vperm.xlu0 %359, %v354
      %v361 = vpop.permute.xlu0 %360
      %364 = vset.pattern.permute.xlu0 0
      %365 = vperm.xlu0 %364, %v355
      %v366 = vpop.permute.xlu0 %365
      %vm368 = vcmask 130048
      %v370 = vsel %vm368, %v356, 0
      %v373 = vsel %vm368, %v357, 0
      %375 = vmatpush.msra.mxu0 0.0
      %376 = vmatpush.msra.mxu0 0.0
      %377 = vmatpush.msra.mxu0 0.0
      %378 = vmatpush.msra.mxu0 0.0
      %379 = vmatpush.msra.mxu0 0.0
      %380 = vmatpush.msra.mxu0 0.0
      %381 = vmatpush.msra.mxu0 0.0
      %382 = vmatpush.msra.mxu0 0.0
      %383 = vmatpush.msra.mxu0 0.0
      %384 = vmatpush.msra.mxu0 0.0
      %385 = vmatpush.msra.mxu0 0.0
      %386 = vmatpush.msra.mxu0 0.0
      %387 = vmatpush.msra.mxu0 0.0
      %388 = vmatpush.msra.mxu0 0.0
      %389 = vmatpush.msra.mxu0 %v336
      %390 = vmatpush.msra.mxu0 %v344
      %391 = vmatmul.f32.gmra.mxu0 %v370
      %v392 = vpop.f32.mrf.mxu0
      %v393 = vadd.f32 %v361, %v392
      %394 = vmatmul.f32.gmra.mxu0 %v373
      %v395 = vpop.f32.mrf.mxu0
      %v396 = vadd.f32 %v366, %v395
      %397 = vdwg.mxu0
      %v398 = vld [vmem:[%s4] sm:$0xff]
      %v399 = vld [vmem:[%s4 + $0x8] sm:$0xff]
      %v401 = vsel %vm368, %v398, 0
      %v404 = vsel %vm368, %v399, 0
      %406 = vmatpush.msra.mxu0 0.0
      %407 = vmatpush.msra.mxu0 0.0
      %408 = vmatpush.msra.mxu0 0.0
      %409 = vmatpush.msra.mxu0 0.0
      %410 = vmatpush.msra.mxu0 0.0
      %411 = vmatpush.msra.mxu0 0.0
      %412 = vmatpush.msra.mxu0 0.0
      %413 = vmatpush.msra.mxu0 0.0
      %414 = vmatpush.msra.mxu0 0.0
      %415 = vmatpush.msra.mxu0 0.0
      %416 = vmatpush.msra.mxu0 0.0
      %417 = vmatpush.msra.mxu0 0.0
      %418 = vmatpush.msra.mxu0 0.0
      %419 = vmatpush.msra.mxu0 0.0
      %420 = vmatpush.msra.mxu0 %v353
      %421 = vmatpush.msra.mxu0 %v336
      %422 = vmatmul.f32.gmra.mxu0 %v401
      %v423 = vpop.f32.mrf.mxu0
      %v424 = vadd.f32 %v361, %v423
      %425 = vmatmul.f32.gmra.mxu0 %v404
      %v426 = vpop.f32.mrf.mxu0
      %v427 = vadd.f32 %v366, %v426
      %428 = vdwg.mxu0
      %429 = vst.msk [vmem:[%s335] sm:$0xff] %vm368, %v393
      %430 = vst.msk [vmem:[%s335 + $0x8] sm:$0xff] %vm368, %v396
      %s431 = scalar_lea.vmem %s335, 16
      %432 = vst.msk [vmem:[%s431] sm:$0xff] %vm368, %v424
      %433 = vst.msk [vmem:[%s431 + $0x8] sm:$0xff] %vm368, %v427
      %p434 = scmp.lt.s32.totalorder %s21, 1
      %s435 = scalar_select %p434, %s21, 1
      %p436 = scmp.lt.s32.totalorder %s22, 0
      %s437 = scalar_select %p436, %s22, 0
      %s438 = smul.addr %s435, 4
      %s439 = sadd.s32 %s437, %s438
      %s440 = smul.addr %s439, 8
      %s441 = scalar_lea.vmem %s6, %s440
      // Predicated region
      $region45: #{upsample_nearest2x_conv1d_pallas.1} parent=43 // pred_check
        %p442 = pneg %p196
      $region46: #{upsample_nearest2x_conv1d_pallas.1} parent=43 // pred_check_branch
        %444 = sbr.rel (%p442) target = $region48
      $region47: #{upsample_nearest2x_conv1d_pallas.1} parent=43 // pred_region
        _
      $region48: #{upsample_nearest2x_conv1d_pallas.1} parent=43 // pred_fallthru
        _
    $region44: #{upsample_nearest2x_conv1d_pallas.1} parent=5 // pred_fallthru
      _
    %p445 = scmp.le.s32.totalorder 2, %s12
    // Predicated region
    $region49: #{upsample_nearest2x_conv1d_pallas.1} parent=5 // pred_check
      %p446 = pneg %p445
    $region50: #{upsample_nearest2x_conv1d_pallas.1} parent=5 // pred_check_branch
      %448 = sbr.rel (%p446) target = $region52
    $region51: #{upsample_nearest2x_conv1d_pallas.1} parent=5 // pred_region
      %s449 = ssub.s32 %s12, 2
      // Predicated region
      $region53: #{upsample_nearest2x_conv1d_pallas.1} parent=51 // pred_check
        %p450 = pneg %p202
      $region54: #{upsample_nearest2x_conv1d_pallas.1} parent=51 // pred_check_branch
        %452 = sbr.rel (%p450) target = $region56
      $region55: #{upsample_nearest2x_conv1d_pallas.1} parent=51 // pred_region
        %p453 = scmp.lt.s32.totalorder %s23, 1
        %s454 = scalar_select %p453, %s23, 1
        %p455 = scmp.lt.s32.totalorder %s24, 0
        %s456 = scalar_select %p455, %s24, 0
        %s457 = smul.addr %s454, 4
        %s458 = sadd.s32 %s456, %s457
        %s459 = smul.addr %s458, 8
        %s460 = scalar_lea.vmem %s6, %s459
      $region56: #{upsample_nearest2x_conv1d_pallas.1} parent=51 // pred_fallthru
        _
    $region52: #{upsample_nearest2x_conv1d_pallas.1} parent=5 // pred_fallthru
      _
  $region6: #{upsample_nearest2x_conv1d_pallas.1} parent=0 // loop_footer
    %s16 = sadd.s32 1, %s12
  $region7: #{upsample_nearest2x_conv1d_pallas.1} parent=0 // loop_footer_branch
    %11 = sbr.rel target = $region3
  $region8: #{upsample_nearest2x_conv1d_pallas.1} parent=0 // loop_exit
    _

</llo_original>
